<compile_context>
chip_gen: v5e
topology: v5e:2x2
jax: 0.10.0
libtpu: 0.0.40
codegen_flags: <defaults>
</compile_context>

<pallas_src>
import jax
import jax.numpy as jnp
import numpy as np
from jax.experimental import pallas as pl
from jax.experimental.pallas import tpu as pltpu

_BN_EPS = 1e-5


def _conv3_kernel(patches_ref, w1_ref, b1_ref, w2_ref, b2_ref, o_ref):
    """Fused Conv3 forward for one batch element.

    patches_ref: (9*C1, HW)  bf16 im2col slab of the padded input
    w1_ref:      (C2, 9*C1)  bf16 3x3 filter with BN scale folded in
    b1_ref:      (C2, 1)     f32  folded BN bias (beta - mean*scale)
    w2_ref:      (Co, C2)    bf16 1x1 filter with BN scale folded in
    b2_ref:      (Co, 1)     f32  folded BN bias
    o_ref:       (Co, HW)    f32  lane-dense output slab
    """
    # --- conv 3x3 (BN pre-folded) as one MXU matmul, f32 accumulate ---
    y = jnp.dot(w1_ref[...], patches_ref[...],
                preferred_element_type=jnp.float32)
    y = y + b1_ref[...]
    # SiLU: exp and reciprocal both ride the EUP slot.
    y = y * pl.reciprocal(1.0 + jnp.exp(-y), approx=True)

    # --- conv 1x1 (BN pre-folded) -> (Co, HW) ---
    z = jnp.dot(w2_ref[...], y.astype(jnp.bfloat16),
                preferred_element_type=jnp.float32)
    z = z + b2_ref[...]
    z = z * pl.reciprocal(1.0 + jnp.exp(-z), approx=True)

    o_ref[...] = z.astype(o_ref.dtype)


def conv3_forward(x, w1, bn1, w2, bn2, *, eps=_BN_EPS):
    """x: (B, C1, H, W) f32 NCHW.  w1: (C2, C1, 3, 3), w2: (C1//2, C1, 1, 1).
    bn1 / bn2: tuples (gamma, beta, running_mean, running_var) (eval mode)."""
    B, C1, H, W = x.shape
    C2 = w1.shape[0]
    Co = w2.shape[0]
    HW = H * W

    # ---- fold eval-mode BN into the conv weights (exact algebra) ----
    g1, be1, m1, v1 = [a.astype(jnp.float32) for a in bn1]
    g2, be2, m2, v2 = [a.astype(jnp.float32) for a in bn2]
    s1 = g1 * jax.lax.rsqrt(v1 + eps)                     # (C2,)
    s2 = g2 * jax.lax.rsqrt(v2 + eps)                     # (Co,)
    w1m = (w1.reshape(C2, C1 * 9).astype(jnp.float32)
           * s1[:, None]).astype(jnp.bfloat16)            # (C2, 9*C1) bf16
    w2m = (w2.reshape(Co, C2).astype(jnp.float32)
           * s2[:, None]).astype(jnp.bfloat16)            # (Co, C2)   bf16
    b1 = (be1 - m1 * s1).reshape(C2, 1)                   # (C2, 1) f32
    b2 = (be2 - m2 * s2).reshape(Co, 1)                   # (Co, 1) f32

    # ---- im2col slab (B, 9*C1, H*W): stack + reshape only, no transposes ----
    # row index = c1*9 + kh*3 + kw, matching w1.reshape(C2, C1*9).
    x_pad = jnp.pad(x, ((0, 0), (0, 0), (1, 1), (1, 1)))
    taps = [x_pad[:, :, kh:kh + H, kw:kw + W]
            for kh in range(3) for kw in range(3)]
    patches = jnp.stack(taps, axis=2).reshape(B, C1 * 9, HW)
    patches = patches.astype(jnp.bfloat16)

    flops = B * (2 * HW * (9 * C1) * C2 + 2 * HW * C2 * Co
                 + 6 * HW * (C2 + Co))
    bytes_accessed = (2 * (patches.size + w1m.size + w2m.size)
                      + 4 * (b1.size + b2.size + B * Co * HW))

    out = pl.pallas_call(
        _conv3_kernel,
        out_shape=jax.ShapeDtypeStruct((B, Co, HW), jnp.float32),
        grid_spec=pltpu.PrefetchScalarGridSpec(
            num_scalar_prefetch=0,
            grid=(B,),                                    # one step per batch element
            in_specs=[
                pl.BlockSpec((None, C1 * 9, HW), lambda b: (b, 0, 0)),
                pl.BlockSpec((C2, C1 * 9), lambda b: (0, 0)),   # resident
                pl.BlockSpec((C2, 1), lambda b: (0, 0)),        # resident
                pl.BlockSpec((Co, C2), lambda b: (0, 0)),       # resident
                pl.BlockSpec((Co, 1), lambda b: (0, 0)),        # resident
            ],
            out_specs=pl.BlockSpec((None, Co, HW), lambda b: (b, 0, 0)),
        ),
        compiler_params=pltpu.CompilerParams(
            dimension_semantics=("parallel",),            # both TCs on v7x
            vmem_limit_bytes=32 * 1024 * 1024),
        cost_estimate=pl.CostEstimate(
            flops=flops,
            transcendentals=B * HW * (C2 + Co),
            bytes_accessed=bytes_accessed),
    )(patches, w1m, b1, w2m, b2)

    # (B, Co, H*W) -> (B, Co, H, W): free reshape, no transpose.
    return out.reshape(B, Co, H, W)


def conv3_reference(x, w1, bn1, w2, bn2, *, eps=_BN_EPS):
    """Pure-JAX f32 reference mirroring the PyTorch forward (eval-mode BN)."""
    def bn(t, params):
        g, b, m, v = params
        scale = (g * jax.lax.rsqrt(v + eps))[None, :, None, None]
        return (t - m[None, :, None, None]) * scale + b[None, :, None, None]

    y = jax.lax.conv_general_dilated(
        x, w1, window_strides=(1, 1), padding=((1, 1), (1, 1)),
        dimension_numbers=("NCHW", "OIHW", "NCHW"))
    y = bn(y, bn1)
    y = y * jax.nn.sigmoid(y)
    z = jax.lax.conv_general_dilated(
        y, w2, window_strides=(1, 1), padding=((0, 0), (0, 0)),
        dimension_numbers=("NCHW", "OIHW", "NCHW"))
    z = bn(z, bn2)
    return z * jax.nn.sigmoid(z)


if __name__ == "__main__":
    # Shapes consistent with the module: c1 == c2 = 32 (required by forward),
    # self.channel = c1 // 2 = 16, spatial 16x16, batch 2.
    B, C, H, W = 2, 32, 16, 16
    Co = C // 2

    key = jax.random.PRNGKey(0)
    kx, kw1, kw2, kb1, kb2 = jax.random.split(key, 5)

    x = jax.random.normal(kx, (B, C, H, W), dtype=jnp.float32)

    w1 = jax.random.normal(kw1, (C, C, 3, 3), dtype=jnp.float32) / np.sqrt(C * 9)
    w2 = jax.random.normal(kw2, (Co, C, 1, 1), dtype=jnp.float32) / np.sqrt(C)

    def make_bn(k, n):
        k1, k2, k3, k4 = jax.random.split(k, 4)
        gamma = 1.0 + 0.1 * jax.random.normal(k1, (n,), dtype=jnp.float32)
        beta = 0.1 * jax.random.normal(k2, (n,), dtype=jnp.float32)
        mean = 0.1 * jax.random.normal(k3, (n,), dtype=jnp.float32)
        var = 1.0 + 0.1 * jax.random.uniform(k4, (n,), dtype=jnp.float32)
        return gamma, beta, mean, var

    bn1 = make_bn(kb1, C)
    bn2 = make_bn(kb2, Co)

    out = conv3_forward(x, w1, bn1, w2, bn2)
    out = jax.block_until_ready(out)

    ref = conv3_reference(x, w1, bn1, w2, bn2)
    # bf16 matmul operands -> tolerance loosened vs the f32-only version.
    np.testing.assert_allclose(np.asarray(out), np.asarray(ref),
                               rtol=5e-2, atol=5e-2)

    print("KERNEL_OK")
</pallas_src>

<mosaic_0001>
module attributes {stable_mosaic.version = 11 : i64} {
  func.func @_conv3_kernel(%arg0: i32, %arg1: memref<1x288x256xbf16, #tpu.memory_space<vmem>>, %arg2: memref<32x288xbf16, #tpu.memory_space<vmem>>, %arg3: memref<32x1xf32, #tpu.memory_space<vmem>>, %arg4: memref<16x32xbf16, #tpu.memory_space<vmem>>, %arg5: memref<16x1xf32, #tpu.memory_space<vmem>>, %arg6: memref<1x16x256xf32, #tpu.memory_space<vmem>>) attributes {dimension_semantics = [#tpu.dimension_semantics<parallel>], iteration_bounds = array<i64: 2>, scalar_prefetch = 0 : i64, scratch_operands = 0 : i64, tpu.core_type = #tpu.core_type<tc>, window_params = [{transform_indices = @transform_0, window_bounds = array<i64: 1, 288, 256>}, {pipeline_mode = #tpu.pipeline_mode<synchronous>, transform_indices = @transform_1, window_bounds = array<i64: 32, 288>}, {pipeline_mode = #tpu.pipeline_mode<synchronous>, transform_indices = @transform_2, window_bounds = array<i64: 32, 1>}, {pipeline_mode = #tpu.pipeline_mode<synchronous>, transform_indices = @transform_3, window_bounds = array<i64: 16, 32>}, {pipeline_mode = #tpu.pipeline_mode<synchronous>, transform_indices = @transform_4, window_bounds = array<i64: 16, 1>}, {transform_indices = @transform_5, window_bounds = array<i64: 1, 16, 256>}]} {
    %c0 = arith.constant 0 : index
    %c0_0 = arith.constant 0 : index
    %0 = vector.load %arg2[%c0, %c0_0] : memref<32x288xbf16, #tpu.memory_space<vmem>>, vector<32x288xbf16>
    %c0_1 = arith.constant 0 : index
    %c0_2 = arith.constant 0 : index
    %c0_3 = arith.constant 0 : index
    %1 = vector.load %arg1[%c0_1, %c0_2, %c0_3] : memref<1x288x256xbf16, #tpu.memory_space<vmem>>, vector<1x288x256xbf16>
    %2 = vector.shape_cast %1 : vector<1x288x256xbf16> to vector<288x256xbf16>
    %cst = arith.constant dense<0.000000e+00> : vector<32x256xf32>
    %3 = tpu.matmul %0, %2, %cst {dimension_numbers = #tpu.dot_dimension_numbers<[1], [0], [0], [1], [0, 0, 1, 1], [], []>} : vector<32x288xbf16>, vector<288x256xbf16>, vector<32x256xf32> -> vector<32x256xf32>
    %c0_4 = arith.constant 0 : index
    %c0_5 = arith.constant 0 : index
    %4 = vector.load %arg3[%c0_4, %c0_5] : memref<32x1xf32, #tpu.memory_space<vmem>>, vector<32x1xf32>
    %5 = vector.broadcast %4 : vector<32x1xf32> to vector<32x256xf32>
    %6 = arith.addf %3, %5 : vector<32x256xf32>
    %cst_6 = arith.constant 0.000000e+00 : f32
    %7 = vector.broadcast %cst_6 : f32 to vector<32x256xf32>
    %8 = arith.subf %7, %6 : vector<32x256xf32>
    %9 = math.exp %8 : vector<32x256xf32>
    %cst_7 = arith.constant 1.000000e+00 : f32
    %10 = vector.broadcast %cst_7 : f32 to vector<32x256xf32>
    %11 = arith.addf %10, %9 : vector<32x256xf32>
    %12 = tpu.reciprocal %11 {approx = true} : vector<32x256xf32> -> vector<32x256xf32>
    %13 = arith.mulf %6, %12 : vector<32x256xf32>
    %c0_8 = arith.constant 0 : index
    %c0_9 = arith.constant 0 : index
    %14 = vector.load %arg4[%c0_8, %c0_9] : memref<16x32xbf16, #tpu.memory_space<vmem>>, vector<16x32xbf16>
    %15 = arith.truncf %13 : vector<32x256xf32> to vector<32x256xbf16>
    %cst_10 = arith.constant dense<0.000000e+00> : vector<16x256xf32>
    %16 = tpu.matmul %14, %15, %cst_10 {dimension_numbers = #tpu.dot_dimension_numbers<[1], [0], [0], [1], [0, 0, 1, 1], [], []>} : vector<16x32xbf16>, vector<32x256xbf16>, vector<16x256xf32> -> vector<16x256xf32>
    %c0_11 = arith.constant 0 : index
    %c0_12 = arith.constant 0 : index
    %17 = vector.load %arg5[%c0_11, %c0_12] : memref<16x1xf32, #tpu.memory_space<vmem>>, vector<16x1xf32>
    %18 = vector.broadcast %17 : vector<16x1xf32> to vector<16x256xf32>
    %19 = arith.addf %16, %18 : vector<16x256xf32>
    %cst_13 = arith.constant 0.000000e+00 : f32
    %20 = vector.broadcast %cst_13 : f32 to vector<16x256xf32>
    %21 = arith.subf %20, %19 : vector<16x256xf32>
    %22 = math.exp %21 : vector<16x256xf32>
    %cst_14 = arith.constant 1.000000e+00 : f32
    %23 = vector.broadcast %cst_14 : f32 to vector<16x256xf32>
    %24 = arith.addf %23, %22 : vector<16x256xf32>
    %25 = tpu.reciprocal %24 {approx = true} : vector<16x256xf32> -> vector<16x256xf32>
    %26 = arith.mulf %19, %25 : vector<16x256xf32>
    %c0_15 = arith.constant 0 : index
    %c0_16 = arith.constant 0 : index
    %c0_17 = arith.constant 0 : index
    %27 = vector.load %arg6[%c0_15, %c0_16, %c0_17] : memref<1x16x256xf32, #tpu.memory_space<vmem>>, vector<1x16x256xf32>
    %28 = vector.shape_cast %27 : vector<1x16x256xf32> to vector<16x256xf32>
    %29 = vector.shape_cast %26 : vector<16x256xf32> to vector<1x16x256xf32>
    tpu.vector_store %arg6[%c0_15, %c0_16, %c0_17], %29 {strides = array<i32>} : memref<1x16x256xf32, #tpu.memory_space<vmem>>, vector<1x16x256xf32>,
    return
  }
  func.func @transform_0(%arg0: i32) -> (i32, i32, i32) {
    %c0_i32 = arith.constant 0 : i32
    %c0_i32_0 = arith.constant 0 : i32
    %c0_i32_1 = arith.constant 0 : i32
    return %arg0, %c0_i32, %c0_i32_0 : i32, i32, i32
  }
  func.func @transform_1(%arg0: i32) -> (i32, i32) {
    %c0_i32 = arith.constant 0 : i32
    %c0_i32_0 = arith.constant 0 : i32
    %c0_i32_1 = arith.constant 0 : i32
    return %c0_i32, %c0_i32_0 : i32, i32
  }
  func.func @transform_2(%arg0: i32) -> (i32, i32) {
    %c0_i32 = arith.constant 0 : i32
    %c0_i32_0 = arith.constant 0 : i32
    %c0_i32_1 = arith.constant 0 : i32
    return %c0_i32, %c0_i32_0 : i32, i32
  }
  func.func @transform_3(%arg0: i32) -> (i32, i32) {
    %c0_i32 = arith.constant 0 : i32
    %c0_i32_0 = arith.constant 0 : i32
    %c0_i32_1 = arith.constant 0 : i32
    return %c0_i32, %c0_i32_0 : i32, i32
  }
  func.func @transform_4(%arg0: i32) -> (i32, i32) {
    %c0_i32 = arith.constant 0 : i32
    %c0_i32_0 = arith.constant 0 : i32
    %c0_i32_1 = arith.constant 0 : i32
    return %c0_i32, %c0_i32_0 : i32, i32
  }
  func.func @transform_5(%arg0: i32) -> (i32, i32, i32) {
    %c0_i32 = arith.constant 0 : i32
    %c0_i32_0 = arith.constant 0 : i32
    %c0_i32_1 = arith.constant 0 : i32
    return %arg0, %c0_i32, %c0_i32_0 : i32, i32, i32
  }
}

</mosaic_0001>

<llo_original>
// kernel: tpu_custom_call.1
$region0: #{tpu_custom_call.1}
  #allocation0 [shape = 'u32[]', space=smem, size = 0x4, offset = 0x4, fixed_abs, tag = 'smem constant byte address 0x4 - core index']
  #allocation1 [shape = 'u32[72,128]{1,0:T(1,128)}', space=vmem, size = 0x9000, scoped, tag = 'internal scratch']
  %s0 = inlined_call_operand.hbm [shape: bf16[2,288,256], index: 0, kind: input, shape index: {}]
  %s1 = inlined_call_operand.vmem [shape: bf16[32,288], index: 1, kind: input, shape index: {}]
  %s2 = inlined_call_operand.vmem [shape: f32[32,1], index: 2, kind: input, shape index: {}]
  %s3 = inlined_call_operand.hbm [shape: bf16[16,32], index: 3, kind: input, shape index: {}]
  %s4 = inlined_call_operand.vmem [shape: f32[16,1], index: 4, kind: input, shape index: {}]
  %s5 = inlined_call_operand.hbm [shape: f32[2,16,256], index: 5, kind: output, shape index: {}]
  %s6 = sld [smem:[#allocation0]]
  $region61: #{tpu_custom_call.1} parent=0
    _
  %s8 = ssub.s32 1, %s6
  %s9 = scalar_select 0, %s8, %s6
  $region1: #{tpu_custom_call.1} parent=0
    #allocation2 [shape = 'u8[294912]{0}', space=vmem, size = 0x48000, scoped, tag = 'input window, operand 0']
    #allocation3 [shape = 's32[2]{0}', space=sflag, size = 0x8, scoped, tag = 'scoped memory for tpu_custom_call.1']
    #allocation4 [shape = 's32[2]{0}', space=sflag, size = 0x8, scoped, tag = 'scoped memory for tpu_custom_call.1']
    #allocation5 [shape = 'u8[4096]{0}', space=vmem, size = 0x1000, scoped, tag = 'input window, operand 3, single buffered']
    #allocation6 [shape = 's32[1]{0}', space=sflag, size = 0x4, scoped, tag = 'scoped memory for tpu_custom_call.1']
    #allocation7 [shape = 'u8[32768]{0}', space=vmem, size = 0x8000, scoped, tag = 'output window, operand 0']
    %10 = vsyncpa [#allocation3], 0
    %s11 = scalar_lea.sflag [#allocation3], 1
    %12 = vsyncpa %s11, 0
    %13 = vsyncpa [#allocation6], 0
    %14 = vsyncpa [#allocation4], 0
    %s15 = scalar_lea.sflag [#allocation4], 1
    %16 = vsyncpa %s15, 0
    loop: start=0, step=1, limit=4
    $region2: #{tpu_custom_call.1} parent=1 // loop_pre_header
      _
    $region3: #{tpu_custom_call.1} parent=1 // loop_header
      %s18 = sphi 0, %s22
      %p19 = scmp.ge.s32.totalorder %s18, 4
      %s28 = sphi 0, %s30
      %s31 = sphi 0, %s28
      %s32 = sphi 0, %s31
      %s48 = sphi 0, %s32
      %s52 = sphi 0, %s52
      %s54 = sphi 0, %s52
      %s55 = sphi 0, %s54
      %s69 = sphi 0, %s55
      %s73 = sphi 0, %s73
      %s75 = sphi 0, %s73
      %s76 = sphi 0, %s75
      %s90 = sphi 0, %s76
      %s94 = sphi 0, %s94
      %s96 = sphi 0, %s94
      %s97 = sphi 0, %s96
      %s111 = sphi 0, %s97
      %s115 = sphi 0, %s115
      %s117 = sphi 0, %s115
      %s118 = sphi 0, %s117
      %s132 = sphi 0, %s118
      %s138 = sphi 0, %s140
      %s141 = sphi 0, %s138
      %s142 = sphi 0, %s141
      %s158 = sphi 0, %s142
    $region4: #{tpu_custom_call.1} parent=1 // loop_header_branch
      %21 = sbr.rel (%p19) target = $region8
    $region5: #{tpu_custom_call.1} parent=1 // loop_body
      %s23 = ssub.s32 %s18, 1
      %s24 = ssub.s32 %s18, 2
      %s25 = sadd.s32 %s18, 1
      %s26 = ssub.s32 %s18, %s25
      %p27 = scmp.eq.s32.totalorder %s26, 0
      %s29 = sadd.s32 %s28, 1
      %s30 = scalar_select %p27, %s28, %s29
      %p33 = pneg %p27
      %p34 = scmp.eq.s32.totalorder %s18, 1
      %p35 = por %p33, %p34
      %p36 = scmp.ne.s32.totalorder %s28, %s31
      %p37 = scmp.eq.s32.totalorder %s18, 0
      %p38 = por %p36, %p37
      %p39 = scmp.ne.s32.totalorder %s28, %s31
      %p40 = scmp.eq.s32.totalorder %s23, 1
      %p41 = por %p39, %p40
      %p42 = scmp.ne.s32.totalorder %s31, %s32
      %p43 = scmp.eq.s32.totalorder %s23, 0
      %p44 = por %p42, %p43
      %p45 = scmp.ne.s32.totalorder %s31, %s32
      %p46 = scmp.eq.s32.totalorder %s24, 1
      %p47 = por %p45, %p46
      %p49 = scmp.ne.s32.totalorder %s32, %s48
      %p50 = scmp.eq.s32.totalorder %s24, 0
      %p51 = por %p49, %p50
      %s53 = sadd.s32 %s52, 1
      %p56 = scmp.eq.s32.totalorder %s18, 1
      %p57 = scmp.ne.s32.totalorder %s52, %s54
      %p58 = scmp.eq.s32.totalorder %s18, 0
      %p59 = por %p57, %p58
      %p60 = scmp.ne.s32.totalorder %s52, %s54
      %p61 = scmp.eq.s32.totalorder %s23, 1
      %p62 = por %p60, %p61
      %p63 = scmp.ne.s32.totalorder %s54, %s55
      %p64 = scmp.eq.s32.totalorder %s23, 0
      %p65 = por %p63, %p64
      %p66 = scmp.ne.s32.totalorder %s54, %s55
      %p67 = scmp.eq.s32.totalorder %s24, 1
      %p68 = por %p66, %p67
      %p70 = scmp.ne.s32.totalorder %s55, %s69
      %p71 = scmp.eq.s32.totalorder %s24, 0
      %p72 = por %p70, %p71
      %s74 = sadd.s32 %s73, 1
      %p77 = scmp.eq.s32.totalorder %s18, 1
      %p78 = scmp.ne.s32.totalorder %s73, %s75
      %p79 = scmp.eq.s32.totalorder %s18, 0
      %p80 = por %p78, %p79
      %p81 = scmp.ne.s32.totalorder %s73, %s75
      %p82 = scmp.eq.s32.totalorder %s23, 1
      %p83 = por %p81, %p82
      %p84 = scmp.ne.s32.totalorder %s75, %s76
      %p85 = scmp.eq.s32.totalorder %s23, 0
      %p86 = por %p84, %p85
      %p87 = scmp.ne.s32.totalorder %s75, %s76
      %p88 = scmp.eq.s32.totalorder %s24, 1
      %p89 = por %p87, %p88
      %p91 = scmp.ne.s32.totalorder %s76, %s90
      %p92 = scmp.eq.s32.totalorder %s24, 0
      %p93 = por %p91, %p92
      %s95 = sadd.s32 %s94, 1
      %p98 = scmp.eq.s32.totalorder %s18, 1
      %p99 = scmp.ne.s32.totalorder %s94, %s96
      %p100 = scmp.eq.s32.totalorder %s18, 0
      %p101 = por %p99, %p100
      %p102 = scmp.ne.s32.totalorder %s94, %s96
      %p103 = scmp.eq.s32.totalorder %s23, 1
      %p104 = por %p102, %p103
      %p105 = scmp.ne.s32.totalorder %s96, %s97
      %p106 = scmp.eq.s32.totalorder %s23, 0
      %p107 = por %p105, %p106
      %p108 = scmp.ne.s32.totalorder %s96, %s97
      %p109 = scmp.eq.s32.totalorder %s24, 1
      %p110 = por %p108, %p109
      %p112 = scmp.ne.s32.totalorder %s97, %s111
      %p113 = scmp.eq.s32.totalorder %s24, 0
      %p114 = por %p112, %p113
      %s116 = sadd.s32 %s115, 1
      %p119 = scmp.eq.s32.totalorder %s18, 1
      %p120 = scmp.ne.s32.totalorder %s115, %s117
      %p121 = scmp.eq.s32.totalorder %s18, 0
      %p122 = por %p120, %p121
      %p123 = scmp.ne.s32.totalorder %s115, %s117
      %p124 = scmp.eq.s32.totalorder %s23, 1
      %p125 = por %p123, %p124
      %p126 = scmp.ne.s32.totalorder %s117, %s118
      %p127 = scmp.eq.s32.totalorder %s23, 0
      %p128 = por %p126, %p127
      %p129 = scmp.ne.s32.totalorder %s117, %s118
      %p130 = scmp.eq.s32.totalorder %s24, 1
      %p131 = por %p129, %p130
      %p133 = scmp.ne.s32.totalorder %s118, %s132
      %p134 = scmp.eq.s32.totalorder %s24, 0
      %p135 = por %p133, %p134
      %s136 = ssub.s32 %s18, %s25
      %p137 = scmp.eq.s32.totalorder %s136, 0
      %s139 = sadd.s32 %s138, 1
      %s140 = scalar_select %p137, %s138, %s139
      %p143 = pneg %p137
      %p144 = scmp.eq.s32.totalorder %s18, 1
      %p145 = por %p143, %p144
      %p146 = scmp.ne.s32.totalorder %s138, %s141
      %p147 = scmp.eq.s32.totalorder %s18, 0
      %p148 = por %p146, %p147
      %p149 = scmp.ne.s32.totalorder %s138, %s141
      %p150 = scmp.eq.s32.totalorder %s23, 1
      %p151 = por %p149, %p150
      %p152 = scmp.ne.s32.totalorder %s141, %s142
      %p153 = scmp.eq.s32.totalorder %s23, 0
      %p154 = por %p152, %p153
      %p155 = scmp.ne.s32.totalorder %s141, %s142
      %p156 = scmp.eq.s32.totalorder %s24, 1
      %p157 = por %p155, %p156
      %p159 = scmp.ne.s32.totalorder %s142, %s158
      %p160 = scmp.eq.s32.totalorder %s24, 0
      %p161 = por %p159, %p160
      %p162 = scmp.le.s32.totalorder 1, %s18
      %p163 = scmp.lt.s32.totalorder %s18, 3
      %p164 = pnand %p162, %p163
      %p165 = pneg %p164
      // Predicated region
      $region9: #{tpu_custom_call.1} parent=5 // pred_check
        _
      $region10: #{tpu_custom_call.1} parent=5 // pred_check_branch
        %167 = sbr.rel (%p164) target = $region12
      $region11: #{tpu_custom_call.1} parent=5 // pred_region
        %s168 = ssub.s32 %s18, 1
        // Predicated region
        $region13: #{tpu_custom_call.1} parent=11 // pred_check
          %p169 = pneg %p65
        $region14: #{tpu_custom_call.1} parent=11 // pred_check_branch
          %171 = sbr.rel (%p169) target = $region16
        $region15: #{tpu_custom_call.1} parent=11 // pred_region
          _
        $region16: #{tpu_custom_call.1} parent=11 // pred_fallthru
          _
        // Predicated region
        $region17: #{tpu_custom_call.1} parent=11 // pred_check
          %p172 = pneg %p86
        $region18: #{tpu_custom_call.1} parent=11 // pred_check_branch
          %174 = sbr.rel (%p172) target = $region20
        $region19: #{tpu_custom_call.1} parent=11 // pred_region
          _
        $region20: #{tpu_custom_call.1} parent=11 // pred_fallthru
          _
        // Predicated region
        $region21: #{tpu_custom_call.1} parent=11 // pred_check
          %p175 = pneg %p107
        $region22: #{tpu_custom_call.1} parent=11 // pred_check_branch
          %177 = sbr.rel (%p175) target = $region24
        $region23: #{tpu_custom_call.1} parent=11 // pred_region
          %179 = vsyncadd [#allocation6], 0
          %s180 = sshll.u32 %s3, 4
          %s181 = int_to_ptr.hbm [resolvable:$true] %s180
          %s182 = sshll.u32 [#allocation5], 4
          %s183 = int_to_ptr.vmem [resolvable:$true] %s182
          %188 = dma.hbm_to_vmem [thread:$0]  %s181, 128, %s183, [#allocation6], 64, 64, 4
        $region24: #{tpu_custom_call.1} parent=11 // pred_fallthru
          _
        // Predicated region
        $region25: #{tpu_custom_call.1} parent=11 // pred_check
          %p189 = pneg %p128
        $region26: #{tpu_custom_call.1} parent=11 // pred_check_branch
          %191 = sbr.rel (%p189) target = $region28
        $region27: #{tpu_custom_call.1} parent=11 // pred_region
          _
        $region28: #{tpu_custom_call.1} parent=11 // pred_fallthru
          _
      $region12: #{tpu_custom_call.1} parent=5 // pred_fallthru
        _
      %p192 = scmp.lt.s32.totalorder %s18, 2
      // Predicated region
      $region29: #{tpu_custom_call.1} parent=5 // pred_check
        %p193 = pneg %p192
      $region30: #{tpu_custom_call.1} parent=5 // pred_check_branch
        %195 = sbr.rel (%p193) target = $region32
      $region31: #{tpu_custom_call.1} parent=5 // pred_region
        // Predicated region
        $region33: #{tpu_custom_call.1} parent=31 // pred_check
          %p196 = pneg %p38
        $region34: #{tpu_custom_call.1} parent=31 // pred_check_branch
          %198 = sbr.rel (%p196) target = $region36
        $region35: #{tpu_custom_call.1} parent=31 // pred_region
          %s199 = sand.u32 %s28, 1
          %s200 = scalar_lea.sflag [#allocation3], %s199
          %s201 = sand.u32 %s28, 1
          %s202 = smul.addr %s201, 288
          %s203 = scalar_lea.vmem [#allocation2], %s202
          %205 = vsyncadd %s200, 0
          %s206 = smul.addr %s18, 72
          %s207 = smul.addr %s206, 4
          %s208 = scalar_lea.hbm %s0, %s207
          %s209 = sshll.u32 %s208, 4
          %s210 = int_to_ptr.hbm [resolvable:$true] %s209
          %s211 = sshll.u32 %s203, 4
          %s212 = int_to_ptr.vmem [resolvable:$true] %s211
          %217 = dma.hbm_to_vmem [thread:$0]  %s210, 4608, %s212, %s200, 128, 128, 8
        $region36: #{tpu_custom_call.1} parent=31 // pred_fallthru
          _
      $region32: #{tpu_custom_call.1} parent=5 // pred_fallthru
        _
      %p218 = scmp.le.s32.totalorder 1, %s18
      %p219 = scmp.lt.s32.totalorder %s18, 3
      %p220 = pnand %p218, %p219
      %p221 = pneg %p220
      // Predicated region
      $region37: #{tpu_custom_call.1} parent=5 // pred_check
        _
      $region38: #{tpu_custom_call.1} parent=5 // pred_check_branch
        %223 = sbr.rel (%p220) target = $region40
      $region39: #{tpu_custom_call.1} parent=5 // pred_region
        %s224 = ssub.s32 %s18, 1
        %s225 = sand.u32 %s31, 1
        %s226 = scalar_lea.sflag [#allocation3], %s225
        %s227 = sand.u32 %s31, 1
        %s228 = smul.addr %s227, 288
        %s229 = scalar_lea.vmem [#allocation2], %s228
        // Predicated region
        $region41: #{tpu_custom_call.1} parent=39 // pred_check
          %p230 = pneg %p44
        $region42: #{tpu_custom_call.1} parent=39 // pred_check_branch
          %232 = sbr.rel (%p230) target = $region44
        $region43: #{tpu_custom_call.1} parent=39 // pred_region
          %234 = dma.done %s226, 4608
        $region44: #{tpu_custom_call.1} parent=39 // pred_fallthru
          _
        // Predicated region
        $region45: #{tpu_custom_call.1} parent=39 // pred_check
          %p235 = pneg %p107
        $region46: #{tpu_custom_call.1} parent=39 // pred_check_branch
          %237 = sbr.rel (%p235) target = $region48
        $region47: #{tpu_custom_call.1} parent=39 // pred_region
          %239 = dma.done [#allocation6], 128
        $region48: #{tpu_custom_call.1} parent=39 // pred_fallthru
          _
        %s240 = sand.u32 %s31, 1
        %s241 = scalar_lea.sflag [#allocation3], %s240
        %s242 = sand.u32 %s31, 1
        %s243 = smul.addr %s242, 288
        %s244 = scalar_lea.vmem [#allocation2], %s243
        %p245 = pneg %p44
        %p246 = pneg %p41
        %p247 = pneg %p65
        %p248 = pneg %p62
        %p249 = pneg %p86
        %p250 = pneg %p83
        %p251 = pneg %p107
        %p252 = pneg %p104
        %p253 = pneg %p128
        %p254 = pneg %p125
        %p255 = pneg %p154
        %p256 = pneg %p151
        %s257 = sand.u32 %s141, 1
        %s258 = scalar_lea.sflag [#allocation4], %s257
        %s259 = sand.u32 %s141, 1
        %s260 = smul.addr %s259, 32
        %s261 = scalar_lea.vmem [#allocation7], %s260
        %v263 = vld [vmem:[%s1] sm:$0xff]
        %v264 = vld [vmem:[%s1 + $0x8] sm:$0xf]
        %v265 = vld [vmem:[%s1 + $0xc] sm:$0xff]
        %v266 = vld [vmem:[%s1 + $0x14] sm:$0xf]
        %v267 = vld [vmem:[%s1 + $0x18] sm:$0xff]
        %v268 = vld [vmem:[%s1 + $0x20] sm:$0xf]
        %v269 = vld [vmem:[%s1 + $0x24] sm:$0xff]
        %v270 = vld [vmem:[%s1 + $0x2c] sm:$0xf]
        %v271 = vld [vmem:[%s229] sm:$0xff]
        %v272 = vld [vmem:[%s229 + $0x8] sm:$0xff]
        %v273 = vld [vmem:[%s229 + $0x10] sm:$0xff]
        %v274 = vld [vmem:[%s229 + $0x18] sm:$0xff]
        %v275 = vld [vmem:[%s229 + $0x20] sm:$0xff]
        %v276 = vld [vmem:[%s229 + $0x28] sm:$0xff]
        %v277 = vld [vmem:[%s229 + $0x30] sm:$0xff]
        %v278 = vld [vmem:[%s229 + $0x38] sm:$0xff]
        %v279 = vld [vmem:[%s229 + $0x40] sm:$0xff]
        %v280 = vld [vmem:[%s229 + $0x48] sm:$0xff]
        %v281 = vld [vmem:[%s229 + $0x50] sm:$0xff]
        %v282 = vld [vmem:[%s229 + $0x58] sm:$0xff]
        %v283 = vld [vmem:[%s229 + $0x60] sm:$0xff]
        %v284 = vld [vmem:[%s229 + $0x68] sm:$0xff]
        %v285 = vld [vmem:[%s229 + $0x70] sm:$0xff]
        %v286 = vld [vmem:[%s229 + $0x78] sm:$0xff]
        %v287 = vld [vmem:[%s229 + $0x80] sm:$0xff]
        %v288 = vld [vmem:[%s229 + $0x88] sm:$0xff]
        %v289 = vld [vmem:[%s229 + $0x90] sm:$0xff]
        %v290 = vld [vmem:[%s229 + $0x98] sm:$0xff]
        %v291 = vld [vmem:[%s229 + $0xa0] sm:$0xff]
        %v292 = vld [vmem:[%s229 + $0xa8] sm:$0xff]
        %v293 = vld [vmem:[%s229 + $0xb0] sm:$0xff]
        %v294 = vld [vmem:[%s229 + $0xb8] sm:$0xff]
        %v295 = vld [vmem:[%s229 + $0xc0] sm:$0xff]
        %v296 = vld [vmem:[%s229 + $0xc8] sm:$0xff]
        %v297 = vld [vmem:[%s229 + $0xd0] sm:$0xff]
        %v298 = vld [vmem:[%s229 + $0xd8] sm:$0xff]
        %v299 = vld [vmem:[%s229 + $0xe0] sm:$0xff]
        %v300 = vld [vmem:[%s229 + $0xe8] sm:$0xff]
        %v301 = vld [vmem:[%s229 + $0xf0] sm:$0xff]
        %v302 = vld [vmem:[%s229 + $0xf8] sm:$0xff]
        %v303 = vld [vmem:[%s229 + $0x100] sm:$0xff]
        %v304 = vld [vmem:[%s229 + $0x108] sm:$0xff]
        %v305 = vld [vmem:[%s229 + $0x110] sm:$0xff]
        %v306 = vld [vmem:[%s229 + $0x118] sm:$0xff]
        %v307 = vld [vmem:[%s2] sm:$0xff]
        %v308 = vld [vmem:[%s2 + $0x8] sm:$0xff]
        %v309 = vld [vmem:[%s2 + $0x10] sm:$0xff]
        %v310 = vld [vmem:[%s2 + $0x18] sm:$0xff]
        %312 = vset.pattern.permute.xlu0 0
        %313 = vperm.xlu0 %312, %v307
        %v314 = vpop.permute.xlu0 %313
        %317 = vset.pattern.permute.xlu0 0
        %318 = vperm.xlu0 %317, %v308
        %v319 = vpop.permute.xlu0 %318
        %322 = vset.pattern.permute.xlu0 0
        %323 = vperm.xlu0 %322, %v309
        %v324 = vpop.permute.xlu0 %323
        %327 = vset.pattern.permute.xlu0 0
        %328 = vperm.xlu0 %327, %v310
        %v329 = vpop.permute.xlu0 %328
        %v339 = vunpack.c.l.b16 %v263
        %v340 = vunpack.c.h.b16 %v263
        %v341 = vunpack.c.l.b16 %v264
        %v342 = vunpack.c.l.b16 %v265
        %v343 = vunpack.c.h.b16 %v265
        %v344 = vunpack.c.l.b16 %v266
        %v345 = vunpack.c.l.b16 %v267
        %v346 = vunpack.c.h.b16 %v267
        %v347 = vunpack.c.l.b16 %v268
        %v348 = vunpack.c.l.b16 %v269
        %v349 = vunpack.c.h.b16 %v269
        %v350 = vunpack.c.l.b16 %v270
        %v351 = vpack.c.b16 %v342, %v339
        %v352 = vpack.c.b16 %v343, %v340
        %v353 = vpack.c.b16 %v344, %v341
        %v354 = vpack.c.b16 %v348, %v345
        %v355 = vpack.c.b16 %v349, %v346
        %v356 = vpack.c.b16 %v350, %v347
        %v397 = vunpack.c.l.b16 %v271
        %v398 = vunpack.c.h.b16 %v271
        %v399 = vunpack.c.l.b16 %v272
        %v400 = vunpack.c.h.b16 %v272
        %v401 = vunpack.c.l.b16 %v273
        %v402 = vunpack.c.h.b16 %v273
        %v403 = vunpack.c.l.b16 %v274
        %v404 = vunpack.c.h.b16 %v274
        %v405 = vunpack.c.l.b16 %v275
        %v406 = vunpack.c.h.b16 %v275
        %v407 = vunpack.c.l.b16 %v276
        %v408 = vunpack.c.h.b16 %v276
        %v409 = vunpack.c.l.b16 %v277
        %v410 = vunpack.c.h.b16 %v277
        %v411 = vunpack.c.l.b16 %v278
        %v412 = vunpack.c.h.b16 %v278
        %v413 = vunpack.c.l.b16 %v279
        %v414 = vunpack.c.h.b16 %v279
        %v415 = vunpack.c.l.b16 %v280
        %v416 = vunpack.c.h.b16 %v280
        %v417 = vunpack.c.l.b16 %v281
        %v418 = vunpack.c.h.b16 %v281
        %v419 = vunpack.c.l.b16 %v282
        %v420 = vunpack.c.h.b16 %v282
        %v421 = vunpack.c.l.b16 %v283
        %v422 = vunpack.c.h.b16 %v283
        %v423 = vunpack.c.l.b16 %v284
        %v424 = vunpack.c.h.b16 %v284
        %v425 = vunpack.c.l.b16 %v285
        %v426 = vunpack.c.h.b16 %v285
        %v427 = vunpack.c.l.b16 %v286
        %v428 = vunpack.c.h.b16 %v286
        %v429 = vunpack.c.l.b16 %v287
        %v430 = vunpack.c.h.b16 %v287
        %v431 = vunpack.c.l.b16 %v288
        %v432 = vunpack.c.h.b16 %v288
        %v433 = vunpack.c.l.b16 %v289
        %v434 = vunpack.c.h.b16 %v289
        %v435 = vunpack.c.l.b16 %v290
        %v436 = vunpack.c.h.b16 %v290
        %v437 = vunpack.c.l.b16 %v291
        %v438 = vunpack.c.h.b16 %v291
        %v439 = vunpack.c.l.b16 %v292
        %v440 = vunpack.c.h.b16 %v292
        %v441 = vunpack.c.l.b16 %v293
        %v442 = vunpack.c.h.b16 %v293
        %v443 = vunpack.c.l.b16 %v294
        %v444 = vunpack.c.h.b16 %v294
        %v445 = vunpack.c.l.b16 %v295
        %v446 = vunpack.c.h.b16 %v295
        %v447 = vunpack.c.l.b16 %v296
        %v448 = vunpack.c.h.b16 %v296
        %v449 = vunpack.c.l.b16 %v297
        %v450 = vunpack.c.h.b16 %v297
        %v451 = vunpack.c.l.b16 %v298
        %v452 = vunpack.c.h.b16 %v298
        %v453 = vunpack.c.l.b16 %v299
        %v454 = vunpack.c.h.b16 %v299
        %v455 = vunpack.c.l.b16 %v300
        %v456 = vunpack.c.h.b16 %v300
        %v457 = vunpack.c.l.b16 %v301
        %v458 = vunpack.c.h.b16 %v301
        %v459 = vunpack.c.l.b16 %v302
        %v460 = vunpack.c.h.b16 %v302
        %v461 = vunpack.c.l.b16 %v303
        %v462 = vunpack.c.h.b16 %v303
        %v463 = vunpack.c.l.b16 %v304
        %v464 = vunpack.c.h.b16 %v304
        %v465 = vunpack.c.l.b16 %v305
        %v466 = vunpack.c.h.b16 %v305
        %v467 = vunpack.c.l.b16 %v306
        %v468 = vunpack.c.h.b16 %v306
        %v469 = vpack.c.b16 %v399, %v397
        %v470 = vpack.c.b16 %v400, %v398
        %v471 = vpack.c.b16 %v403, %v401
        %v472 = vpack.c.b16 %v404, %v402
        %v473 = vpack.c.b16 %v407, %v405
        %v474 = vpack.c.b16 %v408, %v406
        %v475 = vpack.c.b16 %v411, %v409
        %v476 = vpack.c.b16 %v412, %v410
        %v477 = vpack.c.b16 %v415, %v413
        %v478 = vpack.c.b16 %v416, %v414
        %v479 = vpack.c.b16 %v419, %v417
        %v480 = vpack.c.b16 %v420, %v418
        %v481 = vpack.c.b16 %v423, %v421
        %v482 = vpack.c.b16 %v424, %v422
        %v483 = vpack.c.b16 %v427, %v425
        %v484 = vpack.c.b16 %v428, %v426
        %v485 = vpack.c.b16 %v431, %v429
        %v486 = vpack.c.b16 %v432, %v430
        %v487 = vpack.c.b16 %v435, %v433
        %v488 = vpack.c.b16 %v436, %v434
        %v489 = vpack.c.b16 %v439, %v437
        %v490 = vpack.c.b16 %v440, %v438
        %v491 = vpack.c.b16 %v443, %v441
        %v492 = vpack.c.b16 %v444, %v442
        %v493 = vpack.c.b16 %v447, %v445
        %v494 = vpack.c.b16 %v448, %v446
        %v495 = vpack.c.b16 %v451, %v449
        %v496 = vpack.c.b16 %v452, %v450
        %v497 = vpack.c.b16 %v455, %v453
        %v498 = vpack.c.b16 %v456, %v454
        %v499 = vpack.c.b16 %v459, %v457
        %v500 = vpack.c.b16 %v460, %v458
        %v501 = vpack.c.b16 %v463, %v461
        %v502 = vpack.c.b16 %v464, %v462
        %v503 = vpack.c.b16 %v467, %v465
        %v504 = vpack.c.b16 %v468, %v466
        %vm541 = vcmask 261120
        %v543 = vsel %vm541, %v353, 0
        %v546 = vsel %vm541, %v356, 0
        %548 = vmatpush.bf16.msra.mxu0 %v483
        %549 = vmatpush.bf16.msra.mxu0 %v481
        %550 = vmatpush.bf16.msra.mxu0 %v479
        %551 = vmatpush.bf16.msra.mxu0 %v477
        %552 = vmatpush.bf16.msra.mxu0 %v475
        %553 = vmatpush.bf16.msra.mxu0 %v473
        %554 = vmatpush.bf16.msra.mxu0 %v471
        %555 = vmatpush.bf16.msra.mxu0 %v469
        %556 = vmatmul.bf16.gmra.mxu0 %v351
        %v557 = vpop.f32.mrf.mxu0
        %v558 = vadd.f32 %v314, %v557
        %v559 = vpop.f32.mrf.mxu0
        %v560 = vadd.f32 %v319, %v559
        %561 = vmatmul.bf16.gmra.mxu0 %v354
        %v562 = vpop.f32.mrf.mxu0
        %v563 = vadd.f32 %v324, %v562
        %v564 = vpop.f32.mrf.mxu0
        %v565 = vadd.f32 %v329, %v564
        %566 = vdwg.mxu0
        %567 = vmatpush.bf16.msra.mxu0 %v499
        %568 = vmatpush.bf16.msra.mxu0 %v497
        %569 = vmatpush.bf16.msra.mxu0 %v495
        %570 = vmatpush.bf16.msra.mxu0 %v493
        %571 = vmatpush.bf16.msra.mxu0 %v491
        %572 = vmatpush.bf16.msra.mxu0 %v489
        %573 = vmatpush.bf16.msra.mxu0 %v487
        %574 = vmatpush.bf16.msra.mxu0 %v485
        %575 = vmatmul.bf16.gmra.mxu0 %v352
        %v576 = vpop.f32.mrf.mxu0
        %v577 = vadd.f32 %v558, %v576
        %v578 = vpop.f32.mrf.mxu0
        %v579 = vadd.f32 %v560, %v578
        %580 = vmatmul.bf16.gmra.mxu0 %v355
        %v581 = vpop.f32.mrf.mxu0
        %v582 = vadd.f32 %v563, %v581
        %v583 = vpop.f32.mrf.mxu0
        %v584 = vadd.f32 %v565, %v583
        %585 = vdwg.mxu0
        %586 = vmatpush.bf16.msra.mxu0 0
        %587 = vmatpush.bf16.msra.mxu0 0
        %588 = vmatpush.bf16.msra.mxu0 0
        %589 = vmatpush.bf16.msra.mxu0 0
        %590 = vmatpush.bf16.msra.mxu0 0
        %591 = vmatpush.bf16.msra.mxu0 0
        %592 = vmatpush.bf16.msra.mxu0 %v503
        %593 = vmatpush.bf16.msra.mxu0 %v501
        %594 = vmatmul.bf16.gmra.mxu0 %v543
        %v595 = vpop.f32.mrf.mxu0
        %v596 = vadd.f32 %v577, %v595
        %v597 = vpop.f32.mrf.mxu0
        %v598 = vadd.f32 %v579, %v597
        %599 = vmatmul.bf16.gmra.mxu0 %v546
        %v600 = vpop.f32.mrf.mxu0
        %v601 = vadd.f32 %v582, %v600
        %v602 = vpop.f32.mrf.mxu0
        %v603 = vadd.f32 %v584, %v602
        %604 = vdwg.mxu0
        %605 = vmatpush.bf16.msra.mxu0 %v484
        %606 = vmatpush.bf16.msra.mxu0 %v482
        %607 = vmatpush.bf16.msra.mxu0 %v480
        %608 = vmatpush.bf16.msra.mxu0 %v478
        %609 = vmatpush.bf16.msra.mxu0 %v476
        %610 = vmatpush.bf16.msra.mxu0 %v474
        %611 = vmatpush.bf16.msra.mxu0 %v472
        %612 = vmatpush.bf16.msra.mxu0 %v470
        %613 = vmatmul.bf16.gmra.mxu0 %v351
        %v614 = vpop.f32.mrf.mxu0
        %v615 = vadd.f32 %v314, %v614
        %v616 = vpop.f32.mrf.mxu0
        %v617 = vadd.f32 %v319, %v616
        %618 = vmatmul.bf16.gmra.mxu0 %v354
        %v619 = vpop.f32.mrf.mxu0
        %v620 = vadd.f32 %v324, %v619
        %v621 = vpop.f32.mrf.mxu0
        %v622 = vadd.f32 %v329, %v621
        %623 = vdwg.mxu0
        %624 = vmatpush.bf16.msra.mxu0 %v500
        %625 = vmatpush.bf16.msra.mxu0 %v498
        %626 = vmatpush.bf16.msra.mxu0 %v496
        %627 = vmatpush.bf16.msra.mxu0 %v494
        %628 = vmatpush.bf16.msra.mxu0 %v492
        %629 = vmatpush.bf16.msra.mxu0 %v490
        %630 = vmatpush.bf16.msra.mxu0 %v488
        %631 = vmatpush.bf16.msra.mxu0 %v486
        %632 = vmatmul.bf16.gmra.mxu0 %v352
        %v633 = vpop.f32.mrf.mxu0
        %v634 = vadd.f32 %v615, %v633
        %v635 = vpop.f32.mrf.mxu0
        %v636 = vadd.f32 %v617, %v635
        %637 = vmatmul.bf16.gmra.mxu0 %v355
        %v638 = vpop.f32.mrf.mxu0
        %v639 = vadd.f32 %v620, %v638
        %v640 = vpop.f32.mrf.mxu0
        %v641 = vadd.f32 %v622, %v640
        %642 = vdwg.mxu0
        %643 = vmatpush.bf16.msra.mxu0 0
        %644 = vmatpush.bf16.msra.mxu0 0
        %645 = vmatpush.bf16.msra.mxu0 0
        %646 = vmatpush.bf16.msra.mxu0 0
        %647 = vmatpush.bf16.msra.mxu0 0
        %648 = vmatpush.bf16.msra.mxu0 0
        %649 = vmatpush.bf16.msra.mxu0 %v504
        %650 = vmatpush.bf16.msra.mxu0 %v502
        %651 = vmatmul.bf16.gmra.mxu0 %v543
        %v652 = vpop.f32.mrf.mxu0
        %v653 = vadd.f32 %v634, %v652
        %v654 = vpop.f32.mrf.mxu0
        %v655 = vadd.f32 %v636, %v654
        %656 = vmatmul.bf16.gmra.mxu0 %v546
        %v657 = vpop.f32.mrf.mxu0
        %v658 = vadd.f32 %v639, %v657
        %v659 = vpop.f32.mrf.mxu0
        %v660 = vadd.f32 %v641, %v659
        %661 = vdwg.mxu0
        %v662 = vsub.f32 0.0, %v596
        %v663 = vsub.f32 0.0, %v653
        %v664 = vsub.f32 0.0, %v598
        %v665 = vsub.f32 0.0, %v655
        %v666 = vsub.f32 0.0, %v601
        %v667 = vsub.f32 0.0, %v658
        %v668 = vsub.f32 0.0, %v603
        %v669 = vsub.f32 0.0, %v660
        %v670 = vmul.f32 %v662, 1.442695
        %v671 = vpow.pop %v670
        %v672 = vmul.f32 %v663, 1.442695
        %v673 = vpow.pop %v672
        %v674 = vmul.f32 %v664, 1.442695
        %v675 = vpow.pop %v674
        %v676 = vmul.f32 %v665, 1.442695
        %v677 = vpow.pop %v676
        %v678 = vmul.f32 %v666, 1.442695
        %v679 = vpow.pop %v678
        %v680 = vmul.f32 %v667, 1.442695
        %v681 = vpow.pop %v680
        %v682 = vmul.f32 %v668, 1.442695
        %v683 = vpow.pop %v682
        %v684 = vmul.f32 %v669, 1.442695
        %v685 = vpow.pop %v684
        %v686 = vadd.f32 %v671, 1.0
        %v687 = vadd.f32 %v673, 1.0
        %v688 = vadd.f32 %v675, 1.0
        %v689 = vadd.f32 %v677, 1.0
        %v690 = vadd.f32 %v679, 1.0
        %v691 = vadd.f32 %v681, 1.0
        %v692 = vadd.f32 %v683, 1.0
        %v693 = vadd.f32 %v685, 1.0
        %v694 = vrcp.pop %v686
        %v695 = vrcp.pop %v687
        %v696 = vrcp.pop %v688
        %v697 = vrcp.pop %v689
        %v698 = vrcp.pop %v690
        %v699 = vrcp.pop %v691
        %v700 = vrcp.pop %v692
        %v701 = vrcp.pop %v693
        %v702 = vmul.f32 %v596, %v694
        %v703 = vmul.f32 %v653, %v695
        %v704 = vmul.f32 %v598, %v696
        %v705 = vmul.f32 %v655, %v697
        %v706 = vmul.f32 %v601, %v698
        %v707 = vmul.f32 %v658, %v699
        %v708 = vmul.f32 %v603, %v700
        %v709 = vmul.f32 %v660, %v701
        %v710 = vld [vmem:[#allocation5] sm:$0xf]
        %v711 = vld [vmem:[#allocation5 + $0x4] sm:$0xf]
        %v712 = vpack.c.bf16 %v704, %v702
        %v713 = vpack.c.bf16 %v705, %v703
        %v714 = vpack.c.bf16 %v708, %v706
        %v715 = vpack.c.bf16 %v709, %v707
        %v716 = vld [vmem:[%s4] sm:$0xff]
        %v717 = vld [vmem:[%s4 + $0x8] sm:$0xff]
        %719 = vset.pattern.permute.xlu0 0
        %720 = vperm.xlu0 %719, %v716
        %v721 = vpop.permute.xlu0 %720
        %724 = vset.pattern.permute.xlu0 0
        %725 = vperm.xlu0 %724, %v717
        %v726 = vpop.permute.xlu0 %725
        %v730 = vunpack.c.l.b16 %v710
        %v731 = vunpack.c.l.b16 %v711
        %v732 = vpack.c.b16 %v731, %v730
        %v734 = vsel %vm541, %v732, 0
        %736 = vmatpush.bf16.msra.mxu0 0
        %737 = vmatpush.bf16.msra.mxu0 0
        %738 = vmatpush.bf16.msra.mxu0 0
        %739 = vmatpush.bf16.msra.mxu0 0
        %740 = vmatpush.bf16.msra.mxu0 0
        %741 = vmatpush.bf16.msra.mxu0 0
        %742 = vmatpush.bf16.msra.mxu0 %v714
        %743 = vmatpush.bf16.msra.mxu0 %v712
        %744 = vmatmul.bf16.gmra.mxu0 %v734
        %v745 = vpop.f32.mrf.mxu0
        %v746 = vadd.f32 %v721, %v745
        %v747 = vpop.f32.mrf.mxu0
        %v748 = vadd.f32 %v726, %v747
        %749 = vdwg.mxu0
        %750 = vmatpush.bf16.msra.mxu0 0
        %751 = vmatpush.bf16.msra.mxu0 0
        %752 = vmatpush.bf16.msra.mxu0 0
        %753 = vmatpush.bf16.msra.mxu0 0
        %754 = vmatpush.bf16.msra.mxu0 0
        %755 = vmatpush.bf16.msra.mxu0 0
        %756 = vmatpush.bf16.msra.mxu0 %v715
        %757 = vmatpush.bf16.msra.mxu0 %v713
        %758 = vmatmul.bf16.gmra.mxu0 %v734
        %v759 = vpop.f32.mrf.mxu0
        %v760 = vadd.f32 %v721, %v759
        %v761 = vpop.f32.mrf.mxu0
        %v762 = vadd.f32 %v726, %v761
        %763 = vdwg.mxu0
        %v764 = vsub.f32 0.0, %v746
        %v765 = vsub.f32 0.0, %v760
        %v766 = vsub.f32 0.0, %v748
        %v767 = vsub.f32 0.0, %v762
        %v768 = vmul.f32 %v764, 1.442695
        %v769 = vpow.pop %v768
        %v770 = vmul.f32 %v765, 1.442695
        %v771 = vpow.pop %v770
        %v772 = vmul.f32 %v766, 1.442695
        %v773 = vpow.pop %v772
        %v774 = vmul.f32 %v767, 1.442695
        %v775 = vpow.pop %v774
        %v776 = vadd.f32 %v769, 1.0
        %v777 = vadd.f32 %v771, 1.0
        %v778 = vadd.f32 %v773, 1.0
        %v779 = vadd.f32 %v775, 1.0
        %v780 = vrcp.pop %v776
        %v781 = vrcp.pop %v777
        %v782 = vrcp.pop %v778
        %v783 = vrcp.pop %v779
        %v784 = vmul.f32 %v746, %v780
        %v785 = vmul.f32 %v760, %v781
        %v786 = vmul.f32 %v748, %v782
        %v787 = vmul.f32 %v762, %v783
        %788 = vst [vmem:[%s261] sm:$0xff] %v784
        %789 = vst [vmem:[%s261 + $0x8] sm:$0xff] %v785
        %790 = vst [vmem:[%s261 + $0x10] sm:$0xff] %v786
        %791 = vst [vmem:[%s261 + $0x18] sm:$0xff] %v787
        %s792 = sand.u32 %s141, 1
        %s793 = scalar_lea.sflag [#allocation4], %s792
        %s794 = sand.u32 %s141, 1
        %s795 = smul.addr %s794, 32
        %s796 = scalar_lea.vmem [#allocation7], %s795
        // Predicated region
        $region49: #{tpu_custom_call.1} parent=39 // pred_check
          %p797 = pneg %p151
        $region50: #{tpu_custom_call.1} parent=39 // pred_check_branch
          %799 = sbr.rel (%p797) target = $region52
        $region51: #{tpu_custom_call.1} parent=39 // pred_region
          %801 = vsyncadd %s793, 0
          %s802 = smul.addr %s23, 4
          %s803 = smul.addr %s802, 8
          %s804 = scalar_lea.hbm %s5, %s803
          %s805 = sshll.u32 %s796, 4
          %s806 = int_to_ptr.vmem [resolvable:$true] %s805
          %s807 = sshll.u32 %s804, 4
          %s808 = int_to_ptr.hbm [resolvable:$true] %s807
          %813 = dma.vmem_to_hbm [thread:$0]  %s806, 512, %s808, %s793, 256, 256, 16
        $region52: #{tpu_custom_call.1} parent=39 // pred_fallthru
          _
      $region40: #{tpu_custom_call.1} parent=5 // pred_fallthru
        _
      %p814 = scmp.le.s32.totalorder 2, %s18
      // Predicated region
      $region53: #{tpu_custom_call.1} parent=5 // pred_check
        %p815 = pneg %p814
      $region54: #{tpu_custom_call.1} parent=5 // pred_check_branch
        %817 = sbr.rel (%p815) target = $region56
      $region55: #{tpu_custom_call.1} parent=5 // pred_region
        %s818 = ssub.s32 %s18, 2
        // Predicated region
        $region57: #{tpu_custom_call.1} parent=55 // pred_check
          %p819 = pneg %p157
        $region58: #{tpu_custom_call.1} parent=55 // pred_check_branch
          %821 = sbr.rel (%p819) target = $region60
        $region59: #{tpu_custom_call.1} parent=55 // pred_region
          %s822 = sand.u32 %s142, 1
          %s823 = scalar_lea.sflag [#allocation4], %s822
          %s824 = sand.u32 %s142, 1
          %s825 = smul.addr %s824, 32
          %s826 = scalar_lea.vmem [#allocation7], %s825
          %828 = dma.done %s823, 512
        $region60: #{tpu_custom_call.1} parent=55 // pred_fallthru
          _
      $region56: #{tpu_custom_call.1} parent=5 // pred_fallthru
        _
    $region6: #{tpu_custom_call.1} parent=1 // loop_footer
      %s22 = sadd.s32 1, %s18
    $region7: #{tpu_custom_call.1} parent=1 // loop_footer_branch
      %17 = sbr.rel target = $region3
    $region8: #{tpu_custom_call.1} parent=1 // loop_exit
      _
    %829 = vsyncpa [#allocation3], 1
    %s830 = scalar_lea.sflag [#allocation3], 1
    %831 = vsyncpa %s830, 1
    %832 = vsyncpa [#allocation6], 1
    %833 = vsyncpa [#allocation4], 1
    %s834 = scalar_lea.sflag [#allocation4], 1
    %835 = vsyncpa %s834, 1

</llo_original>
